<compile_context>
chip_gen: v6e
topology: v6e:2x2x1
jax: 0.10.0
libtpu: 0.0.40
codegen_flags: <defaults>
</compile_context>

<pallas_src>
import jax
import jax.numpy as jnp
from jax.experimental import pallas as pl
from jax.experimental.pallas import tpu as pltpu


def _round_up(x, m):
    return ((x + m - 1) // m) * m


def _vmem_physical_bytes():
    """Physical per-core VMEM; conservative (v7x) default if the query fails."""
    try:
        info = pltpu.get_tpu_info()
        v = int(getattr(info, "vmem_capacity_bytes", 0))
        if v > 0:
            return v
    except Exception:
        pass
    return 64 << 20  # v7x per-TensorCore (smallest of v5e/v6e/v7x)


# ----------------------- streamed (gridded) kernel ------------------------- #
def _stream_kernel(mes1_ref, mes2_ref, mes3_ref,        # (TB, TN, Wm) bf16
                   w1a_ref, w1b_ref, w1c_ref,            # (Wm, H) f32, 1/N folded
                   b1_ref, w2_ref, b2_ref,               # (1,H) (H,Cp) (1,Cp)
                   out_ref,                               # (TB, Cp)
                   acc1, acc2, acc3):                     # (TB, Wm) f32 scratch
    nj = pl.program_id(1)                                 # trailing N-reduction axis

    @pl.when(nj == 0)
    def _init():
        acc1[...] = jnp.zeros_like(acc1)
        acc2[...] = jnp.zeros_like(acc2)
        acc3[...] = jnp.zeros_like(acc3)

    # Partial node sums for this (B-tile, node-group-tile).  torch.mean's 1/N is
    # folded into W1 on the host, so a plain sum suffices; lane packing keeps
    # each packed node's hidden features in separate lanes (they are combined
    # inside the MXU by the row-tiled W1 slabs in the finalize step).
    acc1[...] += jnp.sum(mes1_ref[...].astype(jnp.float32), axis=1)
    acc2[...] += jnp.sum(mes2_ref[...].astype(jnp.float32), axis=1)
    acc3[...] += jnp.sum(mes3_ref[...].astype(jnp.float32), axis=1)

    @pl.when(nj == pl.num_programs(1) - 1)
    def _finalize():
        # cat([m1,m2,m3],-1) @ W1  ==  sum of three per-message dots
        # (no lane concatenate / vreg repacking in the epilogue).
        h = (jnp.dot(acc1[...], w1a_ref[...], preferred_element_type=jnp.float32)
             + jnp.dot(acc2[...], w1b_ref[...], preferred_element_type=jnp.float32)
             + jnp.dot(acc3[...], w1c_ref[...], preferred_element_type=jnp.float32)
             + b1_ref[...])
        h = jnp.maximum(h, 0.0)                           # MLPLayers activation (ReLU)
        out_ref[...] = (jnp.dot(h, w2_ref[...], preferred_element_type=jnp.float32)
                        + b2_ref[...]).astype(out_ref.dtype)


def _streamed_head(mes1, mes2, mes3, w1, b1, w2, b2, *,
                   tb=None, tn=None, tb_max=256, stream_dtype=jnp.bfloat16):
    """Gridded, software-pipelined path for large message tensors."""
    B, N, H = mes1.shape
    C = w2.shape[1]
    assert w1.shape == (3 * H, H) and b1.shape == (H,) and b2.shape == (C,)

    # ---- node packing: put P = 128//H graph nodes into the 128-wide lane axis.
    P = 128 // H if (H < 128 and 128 % H == 0) else 1
    Wm = P * H                       # packed message width (128 when packing applies)
    Npk = _round_up(N, P)            # zero node-padding is exact for the sum
    Ng = Npk // P                    # packed node-group count (new "row" axis)

    # ---- B-tile: keep >= 2 tiles when possible so the "parallel" axis spans
    #      both TensorCores on v7x (harmless extra grid step on v5e/v6e).
    if tb is None:
        TB = min(_round_up(B, 8), tb_max)
        if B >= 16:
            TB = min(TB, _round_up((B + 1) // 2, 8))
    else:
        TB = _round_up(tb, 8)
    Bp = _round_up(B, TB)

    itemsize = jnp.dtype(stream_dtype).itemsize
    Cp = _round_up(C, 128)           # lane-dense classifier output

    # ---- padding-aware, per-generation VMEM budget ----
    phys = _vmem_physical_bytes()
    budget = max(16 << 20, min(int(phys * 0.7), 96 << 20))
    fixed = (2 * (3 * Wm * H + H + H * Cp + Cp) * 4       # weights/biases (x2 buffers)
             + 2 * TB * Cp * 4                            # output tile (x2 buffers)
             + 3 * TB * Wm * 4)                           # f32 accumulators
    avail = max(budget - fixed, 6 * TB * 16 * Wm * itemsize)
    if tn is None:
        tn_fit = avail // (6 * TB * Wm * itemsize)        # 3 message inputs x 2 buffers
        TN = max(16, (tn_fit // 16) * 16)                 # bf16 (16,128) tile
    else:
        TN = _round_up(tn, 16)
    TN = min(TN, _round_up(Ng, 16))
    Ngp = _round_up(Ng, TN)

    # ---- one-time host-side prep (parameters + message layout) ----
    # TODO(synk): in the real pipeline the (frozen) base_model should emit the
    # messages already in bf16 (ideally pre-summed over nodes) to avoid this
    # extra HBM round-trip; the cast/reshape here stands in for that change.
    def prep(m):
        m = m.astype(stream_dtype)
        m = jnp.pad(m, ((0, Bp - B), (0, Npk - N), (0, 0)))   # zero-pad B and N
        m = m.reshape(Bp, Ng, Wm)                             # pack P nodes per lane-row
        return jnp.pad(m, ((0, 0), (0, Ngp - Ng), (0, 0)))    # zero-pad node groups

    m1p, m2p, m3p = prep(mes1), prep(mes2), prep(mes3)

    # Fold 1/N of the node mean into W1 (sum @ (W1/N) == mean @ W1); row-tile
    # each (H,H) slab P times so packed lane (node p, hidden h) -> row p*H+h
    # multiplies slab[h].
    w1f = w1.astype(jnp.float32) / jnp.float32(N)
    w1a, w1b, w1c = (jnp.tile(w1f[k * H:(k + 1) * H, :], (P, 1)) for k in range(3))
    b1r = b1.reshape(1, H).astype(jnp.float32)
    w2p = jnp.zeros((H, Cp), jnp.float32).at[:, :C].set(w2.astype(jnp.float32))
    b2p = jnp.zeros((1, Cp), jnp.float32).at[0, :C].set(b2.astype(jnp.float32))

    mes_spec = pl.BlockSpec((TB, TN, Wm), lambda i, j: (i, j, 0))
    cst = lambda i, j: (0, 0)        # weights stay resident across the whole grid

    out = pl.pallas_call(
        _stream_kernel,
        out_shape=jax.ShapeDtypeStruct((Bp, Cp), jnp.float32),
        grid_spec=pltpu.PrefetchScalarGridSpec(
            num_scalar_prefetch=0,
            # NOTE: the N reduction MUST remain the trailing grid axis; the
            # output tile is only written on its last step.
            grid=(Bp // TB, Ngp // TN),
            in_specs=[mes_spec, mes_spec, mes_spec,
                      pl.BlockSpec((Wm, H), cst),
                      pl.BlockSpec((Wm, H), cst),
                      pl.BlockSpec((Wm, H), cst),
                      pl.BlockSpec((1, H), cst),
                      pl.BlockSpec((H, Cp), cst),
                      pl.BlockSpec((1, Cp), cst)],
            out_specs=pl.BlockSpec((TB, Cp), lambda i, j: (i, 0)),
            scratch_shapes=[pltpu.VMEM((TB, Wm), jnp.float32)] * 3),
        compiler_params=pltpu.CompilerParams(
            dimension_semantics=("parallel", "arbitrary"),
            vmem_limit_bytes=min(int(phys * 0.85), budget + (8 << 20))),
    )(m1p, m2p, m3p, w1a, w1b, w1c, b1r, w2p, b2p)

    return out[:B, :C]


# ----------------------- tiny-input (ungridded) kernel --------------------- #
def _small_kernel(mes1_ref, mes2_ref, mes3_ref,          # (B, N, H)
                  w1_ref, b1_ref, w2_ref, b2_ref,        # (3H,H) (1,H) (H,C) (1,C)
                  out_ref):                               # (B, C)
    m1 = jnp.mean(mes1_ref[...].astype(jnp.float32), axis=1)
    m2 = jnp.mean(mes2_ref[...].astype(jnp.float32), axis=1)
    m3 = jnp.mean(mes3_ref[...].astype(jnp.float32), axis=1)
    tot = jnp.concatenate([m1, m2, m3], axis=-1)
    h = jnp.maximum(jnp.dot(tot, w1_ref[...], preferred_element_type=jnp.float32)
                    + b1_ref[...], 0.0)
    out_ref[...] = (jnp.dot(h, w2_ref[...], preferred_element_type=jnp.float32)
                    + b2_ref[...]).astype(out_ref.dtype)


def _small_head(mes1, mes2, mes3, w1, b1, w2, b2):
    B, N, H = mes1.shape
    C = w2.shape[1]
    return pl.pallas_call(
        _small_kernel,
        out_shape=jax.ShapeDtypeStruct((B, C), jnp.float32),
    )(mes1, mes2, mes3,
      w1.astype(jnp.float32), b1.reshape(1, H).astype(jnp.float32),
      w2.astype(jnp.float32), b2.reshape(1, C).astype(jnp.float32))


# ------------------------------- dispatcher -------------------------------- #
def propinf_head(mes1, mes2, mes3, w1, b1, w2, b2, *,
                 force_streamed=False, stream_bytes_threshold=8 << 20, **stream_kw):
    """mean(dim=1) over nodes -> concat -> Linear(3H,H)+ReLU -> Linear(H,n_names)."""
    bytes_in = 3 * mes1.size * jnp.dtype(mes1.dtype).itemsize
    if force_streamed or bytes_in > stream_bytes_threshold:
        return _streamed_head(mes1, mes2, mes3, w1, b1, w2, b2, **stream_kw)
    # Tiny inputs: a single ungridded call; grid/padding machinery would only
    # add fixed per-step and layout overhead at these sizes.
    return _small_head(mes1, mes2, mes3, w1, b1, w2, b2)


# ----------------- synthetic frozen base_model (plain JAX) ----------------- #
# TODO(synk): the real base_model is an external GNN restored from
# args.model_path; replaced by a deterministic 1-hop propagation stand-in
# producing the three message tensors.
def synthetic_base_model(x_p, x_h, adj_p, adj_h, wp, wh, wc):
    hp = jnp.einsum('bij,bjd->bid', adj_p, x_p)            # propagate on graph p
    hh = jnp.einsum('bij,bjd->bid', adj_h, x_h)            # propagate on graph h
    mes1 = jnp.tanh(jnp.einsum('bnd,dh->bnh', hp, wp))     # (B, N, H)
    mes2 = jnp.tanh(jnp.einsum('bnd,dh->bnh', hh, wh))     # (B, N, H)
    mes3 = jnp.tanh(jnp.einsum('bnd,dh->bnh', hp + hh, wc))
    return [mes1, mes2, mes3]


# --------------------------------- main ------------------------------------ #
if __name__ == "__main__":
    B, N, D = 8, 16, 16         # batch, graph nodes, node_init_dims
    H = 32                      # hidden_dim
    C = 10                      # n_names (function-name classes)

    key = jax.random.PRNGKey(0)
    ks = jax.random.split(key, 12)

    # module inputs (graph node features + adjacency, as in forward signature)
    batch_x_p = jax.random.normal(ks[0], (B, N, D), jnp.float32)
    batch_x_h = jax.random.normal(ks[1], (B, N, D), jnp.float32)
    batch_adj_p = (jax.random.uniform(ks[2], (B, N, N)) > 0.5).astype(jnp.float32)
    batch_adj_h = (jax.random.uniform(ks[3], (B, N, N)) > 0.5).astype(jnp.float32)

    # frozen base-model stand-in weights
    wp = jax.random.normal(ks[4], (D, H), jnp.float32) * 0.1
    wh = jax.random.normal(ks[5], (D, H), jnp.float32) * 0.1
    wc = jax.random.normal(ks[6], (D, H), jnp.float32) * 0.1

    # trainable head parameters:
    #   MLPLayers([3H, H]) -> Linear(3H, H) + ReLU ;  cls -> Linear(H, C)
    w1 = jax.random.normal(ks[7], (3 * H, H), jnp.float32) * (1.0 / jnp.sqrt(3 * H))
    b1 = jnp.zeros((H,), jnp.float32)
    w2 = jax.random.normal(ks[8], (H, C), jnp.float32) * (1.0 / jnp.sqrt(H))
    b2 = jnp.zeros((C,), jnp.float32)

    def ref_head(m1, m2, m3):
        hi = jax.lax.Precision.HIGHEST
        tot = jnp.concatenate([jnp.mean(t.astype(jnp.float32), axis=1)
                               for t in (m1, m2, m3)], axis=-1)
        h = jnp.maximum(jnp.dot(tot, w1, precision=hi) + b1, 0.0)
        return jnp.dot(h, w2, precision=hi) + b2

    # ---- full forward at the module's demo shapes (tiny -> ungridded path) ----
    mes1, mes2, mes3 = synthetic_base_model(batch_x_p, batch_x_h,
                                            batch_adj_p, batch_adj_h,
                                            wp, wh, wc)
    logits = propinf_head(mes1, mes2, mes3, w1, b1, w2, b2)
    jax.block_until_ready(logits)
    assert logits.shape == (B, C)
    assert jnp.allclose(logits, ref_head(mes1, mes2, mes3), atol=1e-4, rtol=1e-4)

    # ---- streamed/gridded path (bf16 streaming, node-packed 128-wide lanes,
    #      2x2 grid: 2 B-tiles for v7x megacore, 2 node-group tiles) ----
    Bs, Ns = 16, 128
    s1 = jnp.tanh(jax.random.normal(ks[9], (Bs, Ns, H), jnp.float32))
    s2 = jnp.tanh(jax.random.normal(ks[10], (Bs, Ns, H), jnp.float32))
    s3 = jnp.tanh(jax.random.normal(ks[11], (Bs, Ns, H), jnp.float32))
    logits_s = propinf_head(s1, s2, s3, w1, b1, w2, b2,
                            force_streamed=True, tb=8, tn=16)
    jax.block_until_ready(logits_s)
    # reference consumes the same bf16-quantized messages the kernel streams
    q = lambda t: t.astype(jnp.bfloat16).astype(jnp.float32)
    ref_s = ref_head(q(s1), q(s2), q(s3))
    assert logits_s.shape == (Bs, C)
    assert jnp.allclose(logits_s, ref_s, atol=2e-3, rtol=2e-3)

    print("KERNEL_OK")
</pallas_src>

<mosaic_0001>
module attributes {stable_mosaic.version = 11 : i64} {
  func.func @_small_kernel(%arg0: memref<8x16x32xf32, #tpu.memory_space<vmem>>, %arg1: memref<8x16x32xf32, #tpu.memory_space<vmem>>, %arg2: memref<8x16x32xf32, #tpu.memory_space<vmem>>, %arg3: memref<96x32xf32, #tpu.memory_space<vmem>>, %arg4: memref<1x32xf32, #tpu.memory_space<vmem>>, %arg5: memref<32x10xf32, #tpu.memory_space<vmem>>, %arg6: memref<1x10xf32, #tpu.memory_space<vmem>>, %arg7: memref<8x10xf32, #tpu.memory_space<vmem>>) attributes {dimension_semantics = [], scalar_prefetch = 0 : i64, scratch_operands = 0 : i64, tpu.core_type = #tpu.core_type<tc>} {
    %c0 = arith.constant 0 : index
    %c0_0 = arith.constant 0 : index
    %c0_1 = arith.constant 0 : index
    %0 = vector.load %arg0[%c0, %c0_0, %c0_1] : memref<8x16x32xf32, #tpu.memory_space<vmem>>, vector<8x16x32xf32>
    %cst = arith.constant dense<0.000000e+00> : vector<8x32xf32>
    %1 = vector.multi_reduction <add>, %0, %cst [1] : vector<8x16x32xf32> to vector<8x32xf32>
    %cst_2 = arith.constant 1.600000e+01 : f32
    %2 = vector.broadcast %cst_2 : f32 to vector<8x32xf32>
    %3 = arith.divf %1, %2 : vector<8x32xf32>
    %c0_3 = arith.constant 0 : index
    %c0_4 = arith.constant 0 : index
    %c0_5 = arith.constant 0 : index
    %4 = vector.load %arg1[%c0_3, %c0_4, %c0_5] : memref<8x16x32xf32, #tpu.memory_space<vmem>>, vector<8x16x32xf32>
    %cst_6 = arith.constant dense<0.000000e+00> : vector<8x32xf32>
    %5 = vector.multi_reduction <add>, %4, %cst_6 [1] : vector<8x16x32xf32> to vector<8x32xf32>
    %cst_7 = arith.constant 1.600000e+01 : f32
    %6 = vector.broadcast %cst_7 : f32 to vector<8x32xf32>
    %7 = arith.divf %5, %6 : vector<8x32xf32>
    %c0_8 = arith.constant 0 : index
    %c0_9 = arith.constant 0 : index
    %c0_10 = arith.constant 0 : index
    %8 = vector.load %arg2[%c0_8, %c0_9, %c0_10] : memref<8x16x32xf32, #tpu.memory_space<vmem>>, vector<8x16x32xf32>
    %cst_11 = arith.constant dense<0.000000e+00> : vector<8x32xf32>
    %9 = vector.multi_reduction <add>, %8, %cst_11 [1] : vector<8x16x32xf32> to vector<8x32xf32>
    %cst_12 = arith.constant 1.600000e+01 : f32
    %10 = vector.broadcast %cst_12 : f32 to vector<8x32xf32>
    %11 = arith.divf %9, %10 : vector<8x32xf32>
    %12 = tpu.concatenate %3, %7, %11 in 1 : vector<8x32xf32>, vector<8x32xf32>, vector<8x32xf32> -> vector<8x96xf32>
    %c0_13 = arith.constant 0 : index
    %c0_14 = arith.constant 0 : index
    %13 = vector.load %arg3[%c0_13, %c0_14] : memref<96x32xf32, #tpu.memory_space<vmem>>, vector<96x32xf32>
    %cst_15 = arith.constant dense<0.000000e+00> : vector<8x32xf32>
    %14 = tpu.matmul %12, %13, %cst_15 {dimension_numbers = #tpu.dot_dimension_numbers<[1], [0], [0], [1], [0, 0, 1, 1], [], []>} : vector<8x96xf32>, vector<96x32xf32>, vector<8x32xf32> -> vector<8x32xf32>
    %c0_16 = arith.constant 0 : index
    %c0_17 = arith.constant 0 : index
    %15 = vector.load %arg4[%c0_16, %c0_17] : memref<1x32xf32, #tpu.memory_space<vmem>>, vector<1x32xf32>
    %16 = vector.broadcast %15 : vector<1x32xf32> to vector<8x32xf32>
    %17 = arith.addf %14, %16 : vector<8x32xf32>
    %cst_18 = arith.constant 0.000000e+00 : f32
    %18 = vector.broadcast %cst_18 : f32 to vector<8x32xf32>
    %19 = arith.maximumf %17, %18 : vector<8x32xf32>
    %c0_19 = arith.constant 0 : index
    %c0_20 = arith.constant 0 : index
    %20 = vector.load %arg5[%c0_19, %c0_20] : memref<32x10xf32, #tpu.memory_space<vmem>>, vector<32x10xf32>
    %cst_21 = arith.constant dense<0.000000e+00> : vector<8x10xf32>
    %21 = tpu.matmul %19, %20, %cst_21 {dimension_numbers = #tpu.dot_dimension_numbers<[1], [0], [0], [1], [0, 0, 1, 1], [], []>} : vector<8x32xf32>, vector<32x10xf32>, vector<8x10xf32> -> vector<8x10xf32>
    %c0_22 = arith.constant 0 : index
    %c0_23 = arith.constant 0 : index
    %22 = vector.load %arg6[%c0_22, %c0_23] : memref<1x10xf32, #tpu.memory_space<vmem>>, vector<1x10xf32>
    %23 = vector.broadcast %22 : vector<1x10xf32> to vector<8x10xf32>
    %24 = arith.addf %21, %23 : vector<8x10xf32>
    %c0_24 = arith.constant 0 : index
    %c0_25 = arith.constant 0 : index
    %25 = vector.load %arg7[%c0_24, %c0_25] : memref<8x10xf32, #tpu.memory_space<vmem>>, vector<8x10xf32>
    tpu.vector_store %arg7[%c0_24, %c0_25], %24 {strides = array<i32>} : memref<8x10xf32, #tpu.memory_space<vmem>>, vector<8x10xf32>,
    return
  }
}

</mosaic_0001>

<llo_original>
// kernel: tpu_custom_call.1
$region0: #{tpu_custom_call.1}
  #allocation0 [shape = 'u32[]', space=smem, size = 0x4, offset = 0x4, fixed_abs, tag = 'smem constant byte address 0x4 - core index']
  #allocation1 [shape = 'u32[144,128]{1,0:T(1,128)}', space=vmem, size = 0x12000, scoped, tag = 'internal scratch']
  %s0 = inlined_call_operand.vmem [shape: f32[8,16,32], index: 0, kind: input, shape index: {}]
  %s1 = inlined_call_operand.hbm [shape: f32[8,16,32], index: 1, kind: input, shape index: {}]
  %s2 = inlined_call_operand.hbm [shape: f32[8,16,32], index: 2, kind: input, shape index: {}]
  %s3 = inlined_call_operand.vmem [shape: f32[96,32], index: 3, kind: input, shape index: {}]
  %s4 = inlined_call_operand.vmem [shape: f32[1,32], index: 4, kind: input, shape index: {}]
  %s5 = inlined_call_operand.vmem [shape: f32[32,10], index: 5, kind: input, shape index: {}]
  %s6 = inlined_call_operand.vmem [shape: f32[1,10], index: 6, kind: input, shape index: {}]
  %s7 = inlined_call_operand.hbm [shape: f32[8,10], index: 7, kind: output, shape index: {}]
  %s8 = sld [smem:[#allocation0]]
  $region46: #{tpu_custom_call.1} parent=0
    _
  %s10 = ssub.s32 1, %s8
  %s11 = scalar_select 0, %s10, %s8
  $region1: #{tpu_custom_call.1} parent=0
    #allocation2 [shape = 'u8[65536]{0}', space=vmem, size = 0x10000, scoped, tag = 'input window, operand 1, single buffered']
    #allocation3 [shape = 's32[1]{0}', space=sflag, size = 0x4, scoped, tag = 'scoped memory for tpu_custom_call.1']
    #allocation4 [shape = 's32[1]{0}', space=sflag, size = 0x4, scoped, tag = 'scoped memory for tpu_custom_call.1']
    #allocation5 [shape = 'u8[65536]{0}', space=vmem, size = 0x10000, scoped, tag = 'input window, operand 2, single buffered']
    #allocation6 [shape = 's32[1]{0}', space=sflag, size = 0x4, scoped, tag = 'scoped memory for tpu_custom_call.1']
    #allocation7 [shape = 'u8[4096]{0}', space=vmem, size = 0x1000, scoped, tag = 'output window, operand 0, single buffered']
    %12 = vsyncpa [#allocation3], 0
    %13 = vsyncpa [#allocation6], 0
    %14 = vsyncpa [#allocation4], 0
    // Predicated region
    $region2: #{tpu_custom_call.1} parent=1 // pred_check
      _
    $region3: #{tpu_custom_call.1} parent=1 // pred_check_branch
      %16 = sbr.rel (0) target = $region5
    $region4: #{tpu_custom_call.1} parent=1 // pred_region
      _
    $region5: #{tpu_custom_call.1} parent=1 // pred_fallthru
      _
    // Predicated region
    $region6: #{tpu_custom_call.1} parent=1 // pred_check
      _
    $region7: #{tpu_custom_call.1} parent=1 // pred_check_branch
      %18 = sbr.rel (0) target = $region9
    $region8: #{tpu_custom_call.1} parent=1 // pred_region
      %s20 = ssub.s32 2048, 2048
      %21 = vsyncadd [#allocation3], %s20
      %s22 = sshll.u32 [#allocation2], 4
      %s23 = int_to_ptr.vmem [resolvable:$true] %s22
      %28 = dma.hbm_to_vmem [thread:$0]  %s1, 2048, %s23, [#allocation3], 128, 128, 8
    $region9: #{tpu_custom_call.1} parent=1 // pred_fallthru
      _
    // Predicated region
    $region10: #{tpu_custom_call.1} parent=1 // pred_check
      _
    $region11: #{tpu_custom_call.1} parent=1 // pred_check_branch
      %30 = sbr.rel (0) target = $region13
    $region12: #{tpu_custom_call.1} parent=1 // pred_region
      %s32 = ssub.s32 2048, 2048
      %33 = vsyncadd [#allocation6], %s32
      %s34 = sshll.u32 [#allocation5], 4
      %s35 = int_to_ptr.vmem [resolvable:$true] %s34
      %40 = dma.hbm_to_vmem [thread:$0]  %s2, 2048, %s35, [#allocation6], 128, 128, 8
    $region13: #{tpu_custom_call.1} parent=1 // pred_fallthru
      _
    // Predicated region
    $region14: #{tpu_custom_call.1} parent=1 // pred_check
      _
    $region15: #{tpu_custom_call.1} parent=1 // pred_check_branch
      %42 = sbr.rel (0) target = $region17
    $region16: #{tpu_custom_call.1} parent=1 // pred_region
      _
    $region17: #{tpu_custom_call.1} parent=1 // pred_fallthru
      _
    // Predicated region
    $region18: #{tpu_custom_call.1} parent=1 // pred_check
      _
    $region19: #{tpu_custom_call.1} parent=1 // pred_check_branch
      %44 = sbr.rel (0) target = $region21
    $region20: #{tpu_custom_call.1} parent=1 // pred_region
      _
    $region21: #{tpu_custom_call.1} parent=1 // pred_fallthru
      _
    // Predicated region
    $region22: #{tpu_custom_call.1} parent=1 // pred_check
      _
    $region23: #{tpu_custom_call.1} parent=1 // pred_check_branch
      %46 = sbr.rel (0) target = $region25
    $region24: #{tpu_custom_call.1} parent=1 // pred_region
      _
    $region25: #{tpu_custom_call.1} parent=1 // pred_fallthru
      _
    // Predicated region
    $region26: #{tpu_custom_call.1} parent=1 // pred_check
      _
    $region27: #{tpu_custom_call.1} parent=1 // pred_check_branch
      %48 = sbr.rel (0) target = $region29
    $region28: #{tpu_custom_call.1} parent=1 // pred_region
      _
    $region29: #{tpu_custom_call.1} parent=1 // pred_fallthru
      _
    // Predicated region
    $region30: #{tpu_custom_call.1} parent=1 // pred_check
      _
    $region31: #{tpu_custom_call.1} parent=1 // pred_check_branch
      %50 = sbr.rel (0) target = $region33
    $region32: #{tpu_custom_call.1} parent=1 // pred_region
      %51 = dma.done [#allocation3], 2048
    $region33: #{tpu_custom_call.1} parent=1 // pred_fallthru
      _
    // Predicated region
    $region34: #{tpu_custom_call.1} parent=1 // pred_check
      _
    $region35: #{tpu_custom_call.1} parent=1 // pred_check_branch
      %53 = sbr.rel (0) target = $region37
    $region36: #{tpu_custom_call.1} parent=1 // pred_region
      %54 = dma.done [#allocation6], 2048
    $region37: #{tpu_custom_call.1} parent=1 // pred_fallthru
      _
    %v55 = vld [vmem:[%s0] sm:$0xff]
    %v56 = vld [vmem:[%s0 + $0x8] sm:$0xff]
    %v57 = vld [vmem:[%s0 + $0x10] sm:$0xff]
    %v58 = vld [vmem:[%s0 + $0x18] sm:$0xff]
    %v59 = vld [vmem:[%s0 + $0x20] sm:$0xff]
    %v60 = vld [vmem:[%s0 + $0x28] sm:$0xff]
    %v61 = vld [vmem:[%s0 + $0x30] sm:$0xff]
    %v62 = vld [vmem:[%s0 + $0x38] sm:$0xff]
    %v63 = vld [vmem:[%s0 + $0x40] sm:$0xff]
    %v64 = vld [vmem:[%s0 + $0x48] sm:$0xff]
    %v65 = vld [vmem:[%s0 + $0x50] sm:$0xff]
    %v66 = vld [vmem:[%s0 + $0x58] sm:$0xff]
    %v67 = vld [vmem:[%s0 + $0x60] sm:$0xff]
    %v68 = vld [vmem:[%s0 + $0x68] sm:$0xff]
    %v69 = vld [vmem:[%s0 + $0x70] sm:$0xff]
    %v70 = vld [vmem:[%s0 + $0x78] sm:$0xff]
    %vm71 = vcmask 261120
    %v72 = vsel %vm71, %v55, 0.0
    %v73 = vsel %vm71, %v56, 0.0
    %v74 = vadd.f32 %v72, %v73
    %v75 = vrot.slane %v74, 4
    %v76 = vadd.f32 %v74, %v75
    %v77 = vrot.slane %v76, 2
    %v78 = vadd.f32 %v76, %v77
    %v79 = vrot.slane %v78, 1
    %v80 = vadd.f32 %v78, %v79
    %v81 = vsel %vm71, %v57, 0.0
    %v82 = vsel %vm71, %v58, 0.0
    %v83 = vadd.f32 %v81, %v82
    %v84 = vrot.slane %v83, 4
    %v85 = vadd.f32 %v83, %v84
    %v86 = vrot.slane %v85, 2
    %v87 = vadd.f32 %v85, %v86
    %v88 = vrot.slane %v87, 1
    %v89 = vadd.f32 %v87, %v88
    %v90 = vsel %vm71, %v59, 0.0
    %v91 = vsel %vm71, %v60, 0.0
    %v92 = vadd.f32 %v90, %v91
    %v93 = vrot.slane %v92, 4
    %v94 = vadd.f32 %v92, %v93
    %v95 = vrot.slane %v94, 2
    %v96 = vadd.f32 %v94, %v95
    %v97 = vrot.slane %v96, 1
    %v98 = vadd.f32 %v96, %v97
    %v99 = vsel %vm71, %v61, 0.0
    %v100 = vsel %vm71, %v62, 0.0
    %v101 = vadd.f32 %v99, %v100
    %v102 = vrot.slane %v101, 4
    %v103 = vadd.f32 %v101, %v102
    %v104 = vrot.slane %v103, 2
    %v105 = vadd.f32 %v103, %v104
    %v106 = vrot.slane %v105, 1
    %v107 = vadd.f32 %v105, %v106
    %v108 = vsel %vm71, %v63, 0.0
    %v109 = vsel %vm71, %v64, 0.0
    %v110 = vadd.f32 %v108, %v109
    %v111 = vrot.slane %v110, 4
    %v112 = vadd.f32 %v110, %v111
    %v113 = vrot.slane %v112, 2
    %v114 = vadd.f32 %v112, %v113
    %v115 = vrot.slane %v114, 1
    %v116 = vadd.f32 %v114, %v115
    %v117 = vsel %vm71, %v65, 0.0
    %v118 = vsel %vm71, %v66, 0.0
    %v119 = vadd.f32 %v117, %v118
    %v120 = vrot.slane %v119, 4
    %v121 = vadd.f32 %v119, %v120
    %v122 = vrot.slane %v121, 2
    %v123 = vadd.f32 %v121, %v122
    %v124 = vrot.slane %v123, 1
    %v125 = vadd.f32 %v123, %v124
    %v126 = vsel %vm71, %v67, 0.0
    %v127 = vsel %vm71, %v68, 0.0
    %v128 = vadd.f32 %v126, %v127
    %v129 = vrot.slane %v128, 4
    %v130 = vadd.f32 %v128, %v129
    %v131 = vrot.slane %v130, 2
    %v132 = vadd.f32 %v130, %v131
    %v133 = vrot.slane %v132, 1
    %v134 = vadd.f32 %v132, %v133
    %v135 = vsel %vm71, %v69, 0.0
    %v136 = vsel %vm71, %v70, 0.0
    %v137 = vadd.f32 %v135, %v136
    %v138 = vrot.slane %v137, 4
    %v139 = vadd.f32 %v137, %v138
    %v140 = vrot.slane %v139, 2
    %v141 = vadd.f32 %v139, %v140
    %v142 = vrot.slane %v141, 1
    %v143 = vadd.f32 %v141, %v142
    %v144 = vrcp.pop 16.0
    %v145 = vmul.f32 %v80, %v144
    %v146 = vmul.f32 %v89, %v144
    %v147 = vmul.f32 %v98, %v144
    %v148 = vmul.f32 %v107, %v144
    %v149 = vmul.f32 %v116, %v144
    %v150 = vmul.f32 %v125, %v144
    %v151 = vmul.f32 %v134, %v144
    %v152 = vmul.f32 %v143, %v144
    %v153 = vld [vmem:[#allocation2] sm:$0xff]
    %v154 = vld [vmem:[#allocation2 + $0x8] sm:$0xff]
    %v155 = vld [vmem:[#allocation2 + $0x10] sm:$0xff]
    %v156 = vld [vmem:[#allocation2 + $0x18] sm:$0xff]
    %v157 = vld [vmem:[#allocation2 + $0x20] sm:$0xff]
    %v158 = vld [vmem:[#allocation2 + $0x28] sm:$0xff]
    %v159 = vld [vmem:[#allocation2 + $0x30] sm:$0xff]
    %v160 = vld [vmem:[#allocation2 + $0x38] sm:$0xff]
    %v161 = vld [vmem:[#allocation2 + $0x40] sm:$0xff]
    %v162 = vld [vmem:[#allocation2 + $0x48] sm:$0xff]
    %v163 = vld [vmem:[#allocation2 + $0x50] sm:$0xff]
    %v164 = vld [vmem:[#allocation2 + $0x58] sm:$0xff]
    %v165 = vld [vmem:[#allocation2 + $0x60] sm:$0xff]
    %v166 = vld [vmem:[#allocation2 + $0x68] sm:$0xff]
    %v167 = vld [vmem:[#allocation2 + $0x70] sm:$0xff]
    %v168 = vld [vmem:[#allocation2 + $0x78] sm:$0xff]
    %v169 = vsel %vm71, %v153, 0.0
    %v170 = vsel %vm71, %v154, 0.0
    %v171 = vadd.f32 %v169, %v170
    %v172 = vrot.slane %v171, 4
    %v173 = vadd.f32 %v171, %v172
    %v174 = vrot.slane %v173, 2
    %v175 = vadd.f32 %v173, %v174
    %v176 = vrot.slane %v175, 1
    %v177 = vadd.f32 %v175, %v176
    %v178 = vsel %vm71, %v155, 0.0
    %v179 = vsel %vm71, %v156, 0.0
    %v180 = vadd.f32 %v178, %v179
    %v181 = vrot.slane %v180, 4
    %v182 = vadd.f32 %v180, %v181
    %v183 = vrot.slane %v182, 2
    %v184 = vadd.f32 %v182, %v183
    %v185 = vrot.slane %v184, 1
    %v186 = vadd.f32 %v184, %v185
    %v187 = vsel %vm71, %v157, 0.0
    %v188 = vsel %vm71, %v158, 0.0
    %v189 = vadd.f32 %v187, %v188
    %v190 = vrot.slane %v189, 4
    %v191 = vadd.f32 %v189, %v190
    %v192 = vrot.slane %v191, 2
    %v193 = vadd.f32 %v191, %v192
    %v194 = vrot.slane %v193, 1
    %v195 = vadd.f32 %v193, %v194
    %v196 = vsel %vm71, %v159, 0.0
    %v197 = vsel %vm71, %v160, 0.0
    %v198 = vadd.f32 %v196, %v197
    %v199 = vrot.slane %v198, 4
    %v200 = vadd.f32 %v198, %v199
    %v201 = vrot.slane %v200, 2
    %v202 = vadd.f32 %v200, %v201
    %v203 = vrot.slane %v202, 1
    %v204 = vadd.f32 %v202, %v203
    %v205 = vsel %vm71, %v161, 0.0
    %v206 = vsel %vm71, %v162, 0.0
    %v207 = vadd.f32 %v205, %v206
    %v208 = vrot.slane %v207, 4
    %v209 = vadd.f32 %v207, %v208
    %v210 = vrot.slane %v209, 2
    %v211 = vadd.f32 %v209, %v210
    %v212 = vrot.slane %v211, 1
    %v213 = vadd.f32 %v211, %v212
    %v214 = vsel %vm71, %v163, 0.0
    %v215 = vsel %vm71, %v164, 0.0
    %v216 = vadd.f32 %v214, %v215
    %v217 = vrot.slane %v216, 4
    %v218 = vadd.f32 %v216, %v217
    %v219 = vrot.slane %v218, 2
    %v220 = vadd.f32 %v218, %v219
    %v221 = vrot.slane %v220, 1
    %v222 = vadd.f32 %v220, %v221
    %v223 = vsel %vm71, %v165, 0.0
    %v224 = vsel %vm71, %v166, 0.0
    %v225 = vadd.f32 %v223, %v224
    %v226 = vrot.slane %v225, 4
    %v227 = vadd.f32 %v225, %v226
    %v228 = vrot.slane %v227, 2
    %v229 = vadd.f32 %v227, %v228
    %v230 = vrot.slane %v229, 1
    %v231 = vadd.f32 %v229, %v230
    %v232 = vsel %vm71, %v167, 0.0
    %v233 = vsel %vm71, %v168, 0.0
    %v234 = vadd.f32 %v232, %v233
    %v235 = vrot.slane %v234, 4
    %v236 = vadd.f32 %v234, %v235
    %v237 = vrot.slane %v236, 2
    %v238 = vadd.f32 %v236, %v237
    %v239 = vrot.slane %v238, 1
    %v240 = vadd.f32 %v238, %v239
    %v241 = vmul.f32 %v177, %v144
    %v242 = vmul.f32 %v186, %v144
    %v243 = vmul.f32 %v195, %v144
    %v244 = vmul.f32 %v204, %v144
    %v245 = vmul.f32 %v213, %v144
    %v246 = vmul.f32 %v222, %v144
    %v247 = vmul.f32 %v231, %v144
    %v248 = vmul.f32 %v240, %v144
    %v249 = vld [vmem:[#allocation5] sm:$0xff]
    %v250 = vld [vmem:[#allocation5 + $0x8] sm:$0xff]
    %v251 = vld [vmem:[#allocation5 + $0x10] sm:$0xff]
    %v252 = vld [vmem:[#allocation5 + $0x18] sm:$0xff]
    %v253 = vld [vmem:[#allocation5 + $0x20] sm:$0xff]
    %v254 = vld [vmem:[#allocation5 + $0x28] sm:$0xff]
    %v255 = vld [vmem:[#allocation5 + $0x30] sm:$0xff]
    %v256 = vld [vmem:[#allocation5 + $0x38] sm:$0xff]
    %v257 = vld [vmem:[#allocation5 + $0x40] sm:$0xff]
    %v258 = vld [vmem:[#allocation5 + $0x48] sm:$0xff]
    %v259 = vld [vmem:[#allocation5 + $0x50] sm:$0xff]
    %v260 = vld [vmem:[#allocation5 + $0x58] sm:$0xff]
    %v261 = vld [vmem:[#allocation5 + $0x60] sm:$0xff]
    %v262 = vld [vmem:[#allocation5 + $0x68] sm:$0xff]
    %v263 = vld [vmem:[#allocation5 + $0x70] sm:$0xff]
    %v264 = vld [vmem:[#allocation5 + $0x78] sm:$0xff]
    %v265 = vsel %vm71, %v249, 0.0
    %v266 = vsel %vm71, %v250, 0.0
    %v267 = vadd.f32 %v265, %v266
    %v268 = vrot.slane %v267, 4
    %v269 = vadd.f32 %v267, %v268
    %v270 = vrot.slane %v269, 2
    %v271 = vadd.f32 %v269, %v270
    %v272 = vrot.slane %v271, 1
    %v273 = vadd.f32 %v271, %v272
    %v274 = vsel %vm71, %v251, 0.0
    %v275 = vsel %vm71, %v252, 0.0
    %v276 = vadd.f32 %v274, %v275
    %v277 = vrot.slane %v276, 4
    %v278 = vadd.f32 %v276, %v277
    %v279 = vrot.slane %v278, 2
    %v280 = vadd.f32 %v278, %v279
    %v281 = vrot.slane %v280, 1
    %v282 = vadd.f32 %v280, %v281
    %v283 = vsel %vm71, %v253, 0.0
    %v284 = vsel %vm71, %v254, 0.0
    %v285 = vadd.f32 %v283, %v284
    %v286 = vrot.slane %v285, 4
    %v287 = vadd.f32 %v285, %v286
    %v288 = vrot.slane %v287, 2
    %v289 = vadd.f32 %v287, %v288
    %v290 = vrot.slane %v289, 1
    %v291 = vadd.f32 %v289, %v290
    %v292 = vsel %vm71, %v255, 0.0
    %v293 = vsel %vm71, %v256, 0.0
    %v294 = vadd.f32 %v292, %v293
    %v295 = vrot.slane %v294, 4
    %v296 = vadd.f32 %v294, %v295
    %v297 = vrot.slane %v296, 2
    %v298 = vadd.f32 %v296, %v297
    %v299 = vrot.slane %v298, 1
    %v300 = vadd.f32 %v298, %v299
    %v301 = vsel %vm71, %v257, 0.0
    %v302 = vsel %vm71, %v258, 0.0
    %v303 = vadd.f32 %v301, %v302
    %v304 = vrot.slane %v303, 4
    %v305 = vadd.f32 %v303, %v304
    %v306 = vrot.slane %v305, 2
    %v307 = vadd.f32 %v305, %v306
    %v308 = vrot.slane %v307, 1
    %v309 = vadd.f32 %v307, %v308
    %v310 = vsel %vm71, %v259, 0.0
    %v311 = vsel %vm71, %v260, 0.0
    %v312 = vadd.f32 %v310, %v311
    %v313 = vrot.slane %v312, 4
    %v314 = vadd.f32 %v312, %v313
    %v315 = vrot.slane %v314, 2
    %v316 = vadd.f32 %v314, %v315
    %v317 = vrot.slane %v316, 1
    %v318 = vadd.f32 %v316, %v317
    %v319 = vsel %vm71, %v261, 0.0
    %v320 = vsel %vm71, %v262, 0.0
    %v321 = vadd.f32 %v319, %v320
    %v322 = vrot.slane %v321, 4
    %v323 = vadd.f32 %v321, %v322
    %v324 = vrot.slane %v323, 2
    %v325 = vadd.f32 %v323, %v324
    %v326 = vrot.slane %v325, 1
    %v327 = vadd.f32 %v325, %v326
    %v328 = vsel %vm71, %v263, 0.0
    %v329 = vsel %vm71, %v264, 0.0
    %v330 = vadd.f32 %v328, %v329
    %v331 = vrot.slane %v330, 4
    %v332 = vadd.f32 %v330, %v331
    %v333 = vrot.slane %v332, 2
    %v334 = vadd.f32 %v332, %v333
    %v335 = vrot.slane %v334, 1
    %v336 = vadd.f32 %v334, %v335
    %v337 = vmul.f32 %v273, %v144
    %v338 = vmul.f32 %v282, %v144
    %v339 = vmul.f32 %v291, %v144
    %v340 = vmul.f32 %v300, %v144
    %v341 = vmul.f32 %v309, %v144
    %v342 = vmul.f32 %v318, %v144
    %v343 = vmul.f32 %v327, %v144
    %v344 = vmul.f32 %v336, %v144
    %vm353 = vcmask 1041409
    %v354 = vsel %vm353, %v146, %v145
    %vm355 = vcmask 1042434
    %v356 = vsel %vm355, %v147, %v354
    %vm357 = vcmask 1043459
    %v358 = vsel %vm357, %v148, %v356
    %vm359 = vcmask 1044484
    %v360 = vsel %vm359, %v149, %v358
    %vm361 = vcmask 1045509
    %v362 = vsel %vm361, %v150, %v360
    %vm363 = vcmask 1046534
    %v364 = vsel %vm363, %v151, %v362
    %vm365 = vcmask 1047559
    %v366 = vsel %vm365, %v152, %v364
    %v376 = vsel %vm353, %v242, %v241
    %v377 = vsel %vm355, %v243, %v376
    %v378 = vsel %vm357, %v244, %v377
    %v379 = vsel %vm359, %v245, %v378
    %v380 = vsel %vm361, %v246, %v379
    %v381 = vsel %vm363, %v247, %v380
    %v382 = vsel %vm365, %v248, %v381
    %383 = vrot.lane.b32.xlu0 %v382, 32
    %v384 = vpop.permute.xlu0 %383
    %v394 = vsel %vm353, %v338, %v337
    %v395 = vsel %vm355, %v339, %v394
    %v396 = vsel %vm357, %v340, %v395
    %v397 = vsel %vm359, %v341, %v396
    %v398 = vsel %vm361, %v342, %v397
    %v399 = vsel %vm363, %v343, %v398
    %v400 = vsel %vm365, %v344, %v399
    %401 = vrot.lane.b32.xlu0 %v400, 64
    %v402 = vpop.permute.xlu0 %401
    %v404 = vsel %vm71, %v366, %v384
    %vm405 = vcmask 523264
    %v406 = vsel %vm405, %v404, %v402
    %v407 = vld [vmem:[%s3] sm:$0xff]
    %v408 = vld [vmem:[%s3 + $0x8] sm:$0xff]
    %v409 = vld [vmem:[%s3 + $0x10] sm:$0xff]
    %v410 = vld [vmem:[%s3 + $0x18] sm:$0xff]
    %v411 = vld [vmem:[%s3 + $0x20] sm:$0xff]
    %v412 = vld [vmem:[%s3 + $0x28] sm:$0xff]
    %v413 = vld [vmem:[%s3 + $0x30] sm:$0xff]
    %v414 = vld [vmem:[%s3 + $0x38] sm:$0xff]
    %v415 = vld [vmem:[%s3 + $0x40] sm:$0xff]
    %v416 = vld [vmem:[%s3 + $0x48] sm:$0xff]
    %v417 = vld [vmem:[%s3 + $0x50] sm:$0xff]
    %v418 = vld [vmem:[%s3 + $0x58] sm:$0xff]
    %v419 = vld [vmem:[%s4] sm:$0x1]
    %v421 = vlaneseq
    %v422 = vshrl.u32 %v421, 7
    %v423 = vsub.s32 0, %v422
    %v424 = vrot.slane %v419, %v423
    %vm426 = vcmask 785408
    %v428 = vsel %vm426, %v406, 0
    %430 = vmatprep.subr.mxu0 0.0
    %431 = vmatpush1.msra.mxu0 0.0
    %432 = vmatprep.subr.mxu0 0.0
    %433 = vmatpush1.msra.mxu0 0.0
    %434 = vmatprep.subr.mxu0 0.0
    %435 = vmatpush1.msra.mxu0 0.0
    %436 = vmatprep.subr.mxu0 0.0
    %437 = vmatpush1.msra.mxu0 0.0
    %438 = vmatprep.subr.mxu0 0.0
    %439 = vmatpush1.msra.mxu0 %v418
    %440 = vmatprep.subr.mxu0 0.0
    %441 = vmatpush1.msra.mxu0 %v417
    %442 = vmatprep.subr.mxu0 0.0
    %443 = vmatpush1.msra.mxu0 %v416
    %444 = vmatprep.subr.mxu0 0.0
    %445 = vmatpush1.msra.mxu0 %v415
    %446 = vmatprep.subr.mxu0 0.0
    %447 = vmatpush1.msra.mxu0 %v414
    %448 = vmatprep.subr.mxu0 0.0
    %449 = vmatpush1.msra.mxu0 %v413
    %450 = vmatprep.subr.mxu0 0.0
    %451 = vmatpush1.msra.mxu0 %v412
    %452 = vmatprep.subr.mxu0 0.0
    %453 = vmatpush1.msra.mxu0 %v411
    %454 = vmatprep.subr.mxu0 0.0
    %455 = vmatpush1.msra.mxu0 %v410
    %456 = vmatprep.subr.mxu0 0.0
    %457 = vmatpush1.msra.mxu0 %v409
    %458 = vmatprep.subr.mxu0 0.0
    %459 = vmatpush1.msra.mxu0 %v408
    %460 = vmatprep.subr.mxu0 0.0
    %461 = vmatpush1.msra.mxu0 %v407
    %462 = vmatprep.subr.mxu0 0.0
    %463 = vmatpush2.msra.mxu0 0.0
    %464 = vmatprep.subr.mxu0 0.0
    %465 = vmatpush2.msra.mxu0 0.0
    %466 = vmatprep.subr.mxu0 0.0
    %467 = vmatpush2.msra.mxu0 0.0
    %468 = vmatprep.subr.mxu0 0.0
    %469 = vmatpush2.msra.mxu0 0.0
    %470 = vmatprep.subr.mxu0 0.0
    %471 = vmatpush2.msra.mxu0 0.0
    %472 = vmatprep.subr.mxu0 0.0
    %473 = vmatpush2.msra.mxu0 0.0
    %474 = vmatprep.subr.mxu0 0.0
    %475 = vmatpush2.msra.mxu0 0.0
    %476 = vmatprep.subr.mxu0 0.0
    %477 = vmatpush2.msra.mxu0 0.0
    %478 = vmatprep.subr.mxu0 0.0
    %479 = vmatpush2.msra.mxu0 0.0
    %480 = vmatprep.subr.mxu0 0.0
    %481 = vmatpush2.msra.mxu0 0.0
    %482 = vmatprep.subr.mxu0 0.0
    %483 = vmatpush2.msra.mxu0 0.0
    %484 = vmatprep.subr.mxu0 0.0
    %485 = vmatpush2.msra.mxu0 0.0
    %486 = vmatprep.subr.mxu0 0.0
    %487 = vmatpush2.msra.mxu0 0.0
    %488 = vmatprep.subr.mxu0 0.0
    %489 = vmatpush2.msra.mxu0 0.0
    %490 = vmatprep.subr.mxu0 0.0
    %491 = vmatpush2.msra.mxu0 0.0
    %492 = vmatprep.subr.mxu0 0.0
    %493 = vmatpush2.msra.mxu0 0.0
    %494 = vmatprep.mubr.f32.mxu0 0.0
    %495 = vmatmul.mubr.f32.gmra.mxu0 %v428
    %v496 = vpop.f32.mrf.mxu0
    %v497 = vadd.f32 %v424, %v496
    %v498 = vpop.f32.mrf.mxu0
    %499 = vdwg.mxu0
    %v500 = vmax.f32 %v497, 0.0
    %v501 = vld [vmem:[%s5] sm:$0xff]
    %v502 = vld [vmem:[%s5 + $0x8] sm:$0xff]
    %v503 = vld [vmem:[%s5 + $0x10] sm:$0xff]
    %v504 = vld [vmem:[%s5 + $0x18] sm:$0xff]
    %v505 = vld [vmem:[%s6] sm:$0x1]
    %v507 = vlaneseq
    %v508 = vshrl.u32 %v507, 7
    %v509 = vsub.s32 0, %v508
    %v510 = vrot.slane %v505, %v509
    %v513 = vsel %vm71, %v500, 0
    %515 = vmatprep.subr.mxu0 0.0
    %516 = vmatpush1.msra.mxu0 0.0
    %517 = vmatprep.subr.mxu0 0.0
    %518 = vmatpush1.msra.mxu0 0.0
    %519 = vmatprep.subr.mxu0 0.0
    %520 = vmatpush1.msra.mxu0 0.0
    %521 = vmatprep.subr.mxu0 0.0
    %522 = vmatpush1.msra.mxu0 0.0
    %523 = vmatprep.subr.mxu0 0.0
    %524 = vmatpush1.msra.mxu0 0.0
    %525 = vmatprep.subr.mxu0 0.0
    %526 = vmatpush1.msra.mxu0 0.0
    %527 = vmatprep.subr.mxu0 0.0
    %528 = vmatpush1.msra.mxu0 0.0
    %529 = vmatprep.subr.mxu0 0.0
    %530 = vmatpush1.msra.mxu0 0.0
    %531 = vmatprep.subr.mxu0 0.0
    %532 = vmatpush1.msra.mxu0 0.0
    %533 = vmatprep.subr.mxu0 0.0
    %534 = vmatpush1.msra.mxu0 0.0
    %535 = vmatprep.subr.mxu0 0.0
    %536 = vmatpush1.msra.mxu0 0.0
    %537 = vmatprep.subr.mxu0 0.0
    %538 = vmatpush1.msra.mxu0 0.0
    %539 = vmatprep.subr.mxu0 0.0
    %540 = vmatpush1.msra.mxu0 %v504
    %541 = vmatprep.subr.mxu0 0.0
    %542 = vmatpush1.msra.mxu0 %v503
    %543 = vmatprep.subr.mxu0 0.0
    %544 = vmatpush1.msra.mxu0 %v502
    %545 = vmatprep.subr.mxu0 0.0
    %546 = vmatpush1.msra.mxu0 %v501
    %547 = vmatprep.subr.mxu0 0.0
    %548 = vmatpush2.msra.mxu0 0.0
    %549 = vmatprep.subr.mxu0 0.0
    %550 = vmatpush2.msra.mxu0 0.0
    %551 = vmatprep.subr.mxu0 0.0
    %552 = vmatpush2.msra.mxu0 0.0
    %553 = vmatprep.subr.mxu0 0.0
    %554 = vmatpush2.msra.mxu0 0.0
    %555 = vmatprep.subr.mxu0 0.0
    %556 = vmatpush2.msra.mxu0 0.0
    %557 = vmatprep.subr.mxu0 0.0
    %558 = vmatpush2.msra.mxu0 0.0
    %559 = vmatprep.subr.mxu0 0.0
    %560 = vmatpush2.msra.mxu0 0.0
    %561 = vmatprep.subr.mxu0 0.0
    %562 = vmatpush2.msra.mxu0 0.0
    %563 = vmatprep.subr.mxu0 0.0
    %564 = vmatpush2.msra.mxu0 0.0
    %565 = vmatprep.subr.mxu0 0.0
    %566 = vmatpush2.msra.mxu0 0.0
    %567 = vmatprep.subr.mxu0 0.0
    %568 = vmatpush2.msra.mxu0 0.0
    %569 = vmatprep.subr.mxu0 0.0
    %570 = vmatpush2.msra.mxu0 0.0
    %571 = vmatprep.subr.mxu0 0.0
    %572 = vmatpush2.msra.mxu0 0.0
    %573 = vmatprep.subr.mxu0 0.0
    %574 = vmatpush2.msra.mxu0 0.0
    %575 = vmatprep.subr.mxu0 0.0
    %576 = vmatpush2.msra.mxu0 0.0
    %577 = vmatprep.subr.mxu0 0.0
    %578 = vmatpush2.msra.mxu0 0.0
    %579 = vmatprep.mubr.f32.mxu0 0.0
    %580 = vmatmul.mubr.f32.gmra.mxu0 %v513
    %v581 = vpop.f32.mrf.mxu0
    %v582 = vadd.f32 %v510, %v581
    %v583 = vpop.f32.mrf.mxu0
    %584 = vdwg.mxu0
    %vm585 = vcmask 80896
    %586 = vst.msk [vmem:[#allocation7] sm:$0xff] %vm585, %v582
    // Predicated region
    $region38: #{tpu_custom_call.1} parent=1 // pred_check
      _
    $region39: #{tpu_custom_call.1} parent=1 // pred_check_branch
      %588 = sbr.rel (0) target = $region41
    $region40: #{tpu_custom_call.1} parent=1 // pred_region
      %s590 = ssub.s32 128, 128
      %591 = vsyncadd [#allocation4], %s590
      %s593 = sshll.u32 [#allocation7], 4
      %s594 = int_to_ptr.vmem [resolvable:$true] %s593
      %596 = dma.vmem_to_hbm [thread:$0]  %s594, 128, %s7, [#allocation4]
    $region41: #{tpu_custom_call.1} parent=1 // pred_fallthru
      _
    // Predicated region
    $region42: #{tpu_custom_call.1} parent=1 // pred_check
      _
    $region43: #{tpu_custom_call.1} parent=1 // pred_check_branch
      %598 = sbr.rel (0) target = $region45
    $region44: #{tpu_custom_call.1} parent=1 // pred_region
      %599 = dma.done [#allocation4], 128
    $region45: #{tpu_custom_call.1} parent=1 // pred_fallthru
      _
    %600 = vsyncpa [#allocation3], 1
    %601 = vsyncpa [#allocation6], 1
    %602 = vsyncpa [#allocation4], 1

</llo_original>
